<compile_context>
chip_gen: v5e
topology: v5e:2x2
jax: 0.10.0
libtpu: 0.0.40
codegen_flags: <defaults>
</compile_context>

<pallas_src>
import jax
import jax.numpy as jnp
from jax.experimental import pallas as pl
from jax.experimental.pallas import tpu as pltpu


def _cdiv(a, b):
    return (a + b - 1) // b


def _round_up(a, m):
    return _cdiv(a, m) * m


def _make_critic_kernel(n_hidden):
    """Kernel closed over the (static) number of hidden Linear layers.

    Ref order:
      state, action,
      W1_state, W1_action, b1,                  # first hidden layer (concat-free)
      W2, b2, ..., Wn, bn,                      # remaining hidden layers
      w_out_row (1, h_last), b_out (1, 1),      # output layer
      out (1, tb)                               # lane-dense output tile
    """

    def kernel(state_ref, action_ref, w1s_ref, w1a_ref, b1_ref, *refs):
        out_ref = refs[-1]

        # First hidden layer: split matmul replaces torch.cat + matmul.
        # bf16 operands, f32 accumulation on the MXU.
        x = jnp.dot(state_ref[...], w1s_ref[...], preferred_element_type=jnp.float32)
        x = x + jnp.dot(action_ref[...], w1a_ref[...], preferred_element_type=jnp.float32)
        x = jnp.maximum(x + b1_ref[...], 0.0)

        # Remaining hidden layers: x = relu(x @ W + b), bf16 operands / f32 accum.
        for k in range(n_hidden - 1):
            w = refs[2 * k][...]
            b = refs[2 * k + 1][...]
            x = jnp.dot(x.astype(w.dtype), w, preferred_element_type=jnp.float32) + b
            x = jnp.maximum(x, 0.0)

        # Output layer Linear(h_last, 1), produced lane-dense:
        #   y_row (1, tb) = w_out_row (1, h) . x (tb, h)^T   (a @ b.T MXU pattern)
        w_out = refs[2 * (n_hidden - 1)][...]       # (1, h_last) bf16
        b_out = refs[2 * (n_hidden - 1) + 1][...]   # (1, 1) f32
        y_row = jax.lax.dot_general(
            w_out, x.astype(w_out.dtype),
            dimension_numbers=(((1,), (1,)), ((), ())),
            preferred_element_type=jnp.float32)      # (1, tb)
        out_ref[...] = (y_row + b_out).astype(out_ref.dtype)

    return kernel


def critic_forward(state, action, params, *, tb=None):
    """params: list of (W, b) tuples, W shaped (in, out); last entry is the
    output layer Linear(h_last, 1). Returns (batch, 1) f32."""
    n_hidden = len(params) - 1
    assert n_hidden >= 1, "Critic needs at least one hidden layer"
    batch, state_dim = state.shape
    _, action_dim = action.shape

    # Split the first hidden layer's weight so no concat is needed in-kernel.
    w1, b1 = params[0]
    assert w1.shape[0] == state_dim + action_dim, \
        "h_sizes[0] must equal state_dim + action_dim"
    w1_s = w1[:state_dim].astype(jnp.bfloat16)
    w1_a = w1[state_dim:].astype(jnp.bfloat16)
    b1 = b1.reshape(1, -1).astype(jnp.float32)

    # Output layer as a (1, h) bf16 row + (1, 1) f32 bias.
    w_out, b_out = params[-1]
    w_out_row = w_out.reshape(1, -1).astype(jnp.bfloat16)
    b_out = b_out.reshape(1, 1).astype(jnp.float32)

    flat_inputs = [state.astype(jnp.bfloat16), action.astype(jnp.bfloat16),
                   w1_s, w1_a, b1]
    for w, b in params[1:-1]:
        flat_inputs.extend((w.astype(jnp.bfloat16),
                            b.reshape(1, -1).astype(jnp.float32)))
    flat_inputs.extend((w_out_row, b_out))

    # Batch tiling: big tiles (VMEM footprint is tiny even at 4096 rows), and
    # >= 2 grid steps for medium batches so the "parallel" axis can use both
    # TensorCores on v7x. Tiny batches stay single-tile.
    TB_CAP = 4096
    if tb is None:
        if batch <= 16:
            tb = batch
        elif batch <= 2 * TB_CAP:
            tb = min(_round_up(_cdiv(batch, 2), 8), TB_CAP)
        else:
            tb = TB_CAP
    num_tiles = _cdiv(batch, tb)

    rows = lambda i: (i, 0)     # batch-tiled arrays
    const = lambda i: (0, 0)    # parameters: same block every step -> DMA'd once

    in_specs = [
        pl.BlockSpec((tb, state_dim), rows),
        pl.BlockSpec((tb, action_dim), rows),
    ]
    for p in flat_inputs[2:]:
        in_specs.append(pl.BlockSpec(p.shape, const))

    # Lane-dense output: one (1, tb) row per tile.
    out_spec = pl.BlockSpec((1, tb), rows)

    # Advisory cost estimate (helps XLA schedule around the custom call).
    flops = 2 * batch * sum(int(w.shape[0]) * int(w.shape[1]) for w, _ in params)
    bytes_accessed = (sum(int(a.size) * a.dtype.itemsize for a in flat_inputs)
                      + int(num_tiles) * int(tb) * 4)

    kernel = _make_critic_kernel(n_hidden)
    out = pl.pallas_call(
        kernel,
        out_shape=jax.ShapeDtypeStruct((num_tiles, tb), jnp.float32),
        grid=(num_tiles,),
        in_specs=in_specs,
        out_specs=out_spec,
        compiler_params=pltpu.CompilerParams(
            dimension_semantics=("parallel",),
        ),
        cost_estimate=pl.CostEstimate(
            flops=flops, transcendentals=0, bytes_accessed=bytes_accessed),
    )(*flat_inputs)

    # Un-pad / reshape back to (batch, 1). Tail rows of the last tile read
    # garbage (row-independent math) and are sliced away here.
    return out.reshape(num_tiles * tb)[:batch].reshape(batch, 1)


def init_critic_params(key, h_sizes):
    """Deterministic init mirroring torch.nn.Linear defaults:
    U(-1/sqrt(fan_in), 1/sqrt(fan_in)) for both weights and biases.
    Weights are returned transposed to (in, out)."""
    sizes = list(h_sizes) + [1]  # hidden layers + final Linear(h_sizes[-1], 1)
    params = []
    for fan_in, fan_out in zip(sizes[:-1], sizes[1:]):
        key, kw, kb = jax.random.split(key, 3)
        bound = 1.0 / jnp.sqrt(jnp.float32(fan_in))
        w = jax.random.uniform(kw, (fan_in, fan_out), jnp.float32, -bound, bound)
        b = jax.random.uniform(kb, (1, fan_out), jnp.float32, -bound, bound)
        params.append((w, b))
    return params


def critic_reference(state, action, params):
    """Pure-JAX f32 reference (matches the PyTorch module)."""
    x = jnp.concatenate([state, action], axis=1)
    for w, b in params[:-1]:
        x = jnp.maximum(x @ w + b, 0.0)
    w, b = params[-1]
    return x @ w + b


if __name__ == "__main__":
    # Small shapes consistent with the module: state_dim + action_dim == h_sizes[0]
    batch = 4
    state_dim = 24
    action_dim = 8
    h_sizes = [32, 64, 32]  # Linear(32,64), Linear(64,32), out: Linear(32,1)

    key = jax.random.PRNGKey(0)
    key, ks, ka = jax.random.split(key, 3)
    state = jax.random.normal(ks, (batch, state_dim), jnp.float32)
    action = jax.random.normal(ka, (batch, action_dim), jnp.float32)
    params = init_critic_params(key, h_sizes)

    out = jax.block_until_ready(critic_forward(state, action, params))
    ref = critic_reference(state, action, params)
    assert out.shape == (batch, 1), out.shape
    # bf16 MXU operands -> looser tolerance vs. the f32 reference.
    assert jnp.allclose(out, ref, atol=5e-2, rtol=5e-2), (out, ref)

    # Multi-tile path: default tb splits batch=36 into 2 tiles of 24 rows
    # (padded tail rows only affect their own (sliced-away) output lanes).
    batch2 = 36
    key, ks2, ka2 = jax.random.split(key, 3)
    state2 = jax.random.normal(ks2, (batch2, state_dim), jnp.float32)
    action2 = jax.random.normal(ka2, (batch2, action_dim), jnp.float32)
    out2 = jax.block_until_ready(critic_forward(state2, action2, params))
    ref2 = critic_reference(state2, action2, params)
    assert out2.shape == (batch2, 1), out2.shape
    assert jnp.allclose(out2, ref2, atol=5e-2, rtol=5e-2), (out2, ref2)

    print("KERNEL_OK")
</pallas_src>

<mosaic_0001>
module attributes {stable_mosaic.version = 11 : i64} {
  func.func @kernel(%arg0: i32, %arg1: memref<4x24xbf16, #tpu.memory_space<vmem>>, %arg2: memref<4x8xbf16, #tpu.memory_space<vmem>>, %arg3: memref<24x64xbf16, #tpu.memory_space<vmem>>, %arg4: memref<8x64xbf16, #tpu.memory_space<vmem>>, %arg5: memref<1x64xf32, #tpu.memory_space<vmem>>, %arg6: memref<64x32xbf16, #tpu.memory_space<vmem>>, %arg7: memref<1x32xf32, #tpu.memory_space<vmem>>, %arg8: memref<1x32xbf16, #tpu.memory_space<vmem>>, %arg9: memref<1x1xf32, #tpu.memory_space<vmem>>, %arg10: memref<1x4xf32, #tpu.memory_space<vmem>>) attributes {dimension_semantics = [#tpu.dimension_semantics<parallel>], iteration_bounds = array<i64: 1>, scalar_prefetch = 0 : i64, scratch_operands = 0 : i64, tpu.core_type = #tpu.core_type<tc>, window_params = [{transform_indices = @transform_0, window_bounds = array<i64: 4, 24>}, {transform_indices = @transform_1, window_bounds = array<i64: 4, 8>}, {pipeline_mode = #tpu.pipeline_mode<synchronous>, transform_indices = @transform_2, window_bounds = array<i64: 24, 64>}, {pipeline_mode = #tpu.pipeline_mode<synchronous>, transform_indices = @transform_3, window_bounds = array<i64: 8, 64>}, {pipeline_mode = #tpu.pipeline_mode<synchronous>, transform_indices = @transform_4, window_bounds = array<i64: 1, 64>}, {pipeline_mode = #tpu.pipeline_mode<synchronous>, transform_indices = @transform_5, window_bounds = array<i64: 64, 32>}, {pipeline_mode = #tpu.pipeline_mode<synchronous>, transform_indices = @transform_6, window_bounds = array<i64: 1, 32>}, {pipeline_mode = #tpu.pipeline_mode<synchronous>, transform_indices = @transform_7, window_bounds = array<i64: 1, 32>}, {pipeline_mode = #tpu.pipeline_mode<synchronous>, transform_indices = @transform_8, window_bounds = array<i64: 1, 1>}, {transform_indices = @transform_9, window_bounds = array<i64: 1, 4>}]} {
    %c0 = arith.constant 0 : index
    %c0_0 = arith.constant 0 : index
    %0 = vector.load %arg1[%c0, %c0_0] : memref<4x24xbf16, #tpu.memory_space<vmem>>, vector<4x24xbf16>
    %c0_1 = arith.constant 0 : index
    %c0_2 = arith.constant 0 : index
    %1 = vector.load %arg3[%c0_1, %c0_2] : memref<24x64xbf16, #tpu.memory_space<vmem>>, vector<24x64xbf16>
    %cst = arith.constant dense<0.000000e+00> : vector<4x64xf32>
    %2 = tpu.matmul %0, %1, %cst {dimension_numbers = #tpu.dot_dimension_numbers<[1], [0], [0], [1], [0, 0, 1, 1], [], []>} : vector<4x24xbf16>, vector<24x64xbf16>, vector<4x64xf32> -> vector<4x64xf32>
    %c0_3 = arith.constant 0 : index
    %c0_4 = arith.constant 0 : index
    %3 = vector.load %arg2[%c0_3, %c0_4] : memref<4x8xbf16, #tpu.memory_space<vmem>>, vector<4x8xbf16>
    %c0_5 = arith.constant 0 : index
    %c0_6 = arith.constant 0 : index
    %4 = vector.load %arg4[%c0_5, %c0_6] : memref<8x64xbf16, #tpu.memory_space<vmem>>, vector<8x64xbf16>
    %cst_7 = arith.constant dense<0.000000e+00> : vector<4x64xf32>
    %5 = tpu.matmul %3, %4, %cst_7 {dimension_numbers = #tpu.dot_dimension_numbers<[1], [0], [0], [1], [0, 0, 1, 1], [], []>} : vector<4x8xbf16>, vector<8x64xbf16>, vector<4x64xf32> -> vector<4x64xf32>
    %6 = arith.addf %2, %5 : vector<4x64xf32>
    %c0_8 = arith.constant 0 : index
    %c0_9 = arith.constant 0 : index
    %7 = vector.load %arg5[%c0_8, %c0_9] : memref<1x64xf32, #tpu.memory_space<vmem>>, vector<1x64xf32>
    %8 = vector.broadcast %7 : vector<1x64xf32> to vector<4x64xf32>
    %9 = arith.addf %6, %8 : vector<4x64xf32>
    %cst_10 = arith.constant 0.000000e+00 : f32
    %10 = vector.broadcast %cst_10 : f32 to vector<4x64xf32>
    %11 = arith.maximumf %9, %10 : vector<4x64xf32>
    %c0_11 = arith.constant 0 : index
    %c0_12 = arith.constant 0 : index
    %12 = vector.load %arg6[%c0_11, %c0_12] : memref<64x32xbf16, #tpu.memory_space<vmem>>, vector<64x32xbf16>
    %c0_13 = arith.constant 0 : index
    %c0_14 = arith.constant 0 : index
    %13 = vector.load %arg7[%c0_13, %c0_14] : memref<1x32xf32, #tpu.memory_space<vmem>>, vector<1x32xf32>
    %14 = arith.truncf %11 : vector<4x64xf32> to vector<4x64xbf16>
    %cst_15 = arith.constant dense<0.000000e+00> : vector<4x32xf32>
    %15 = tpu.matmul %14, %12, %cst_15 {dimension_numbers = #tpu.dot_dimension_numbers<[1], [0], [0], [1], [0, 0, 1, 1], [], []>} : vector<4x64xbf16>, vector<64x32xbf16>, vector<4x32xf32> -> vector<4x32xf32>
    %16 = vector.broadcast %13 : vector<1x32xf32> to vector<4x32xf32>
    %17 = arith.addf %15, %16 : vector<4x32xf32>
    %cst_16 = arith.constant 0.000000e+00 : f32
    %18 = vector.broadcast %cst_16 : f32 to vector<4x32xf32>
    %19 = arith.maximumf %17, %18 : vector<4x32xf32>
    %c0_17 = arith.constant 0 : index
    %c0_18 = arith.constant 0 : index
    %20 = vector.load %arg8[%c0_17, %c0_18] : memref<1x32xbf16, #tpu.memory_space<vmem>>, vector<1x32xbf16>
    %c0_19 = arith.constant 0 : index
    %c0_20 = arith.constant 0 : index
    %21 = vector.load %arg9[%c0_19, %c0_20] : memref<1x1xf32, #tpu.memory_space<vmem>>, vector<1x1xf32>
    %22 = arith.truncf %19 : vector<4x32xf32> to vector<4x32xbf16>
    %cst_21 = arith.constant dense<0.000000e+00> : vector<1x4xf32>
    %23 = tpu.matmul %20, %22, %cst_21 {dimension_numbers = #tpu.dot_dimension_numbers<[1], [1], [0], [0], [0, 0, 1, 0], [], []>} : vector<1x32xbf16>, vector<4x32xbf16>, vector<1x4xf32> -> vector<1x4xf32>
    %24 = vector.broadcast %21 : vector<1x1xf32> to vector<1x4xf32>
    %25 = arith.addf %23, %24 : vector<1x4xf32>
    %c0_22 = arith.constant 0 : index
    %c0_23 = arith.constant 0 : index
    %26 = vector.load %arg10[%c0_22, %c0_23] : memref<1x4xf32, #tpu.memory_space<vmem>>, vector<1x4xf32>
    tpu.vector_store %arg10[%c0_22, %c0_23], %25 {strides = array<i32>} : memref<1x4xf32, #tpu.memory_space<vmem>>, vector<1x4xf32>,
    return
  }
  func.func @transform_0(%arg0: i32) -> (i32, i32) {
    %c0_i32 = arith.constant 0 : i32
    %c0_i32_0 = arith.constant 0 : i32
    return %arg0, %c0_i32 : i32, i32
  }
  func.func @transform_1(%arg0: i32) -> (i32, i32) {
    %c0_i32 = arith.constant 0 : i32
    %c0_i32_0 = arith.constant 0 : i32
    return %arg0, %c0_i32 : i32, i32
  }
  func.func @transform_2(%arg0: i32) -> (i32, i32) {
    %c0_i32 = arith.constant 0 : i32
    %c0_i32_0 = arith.constant 0 : i32
    %c0_i32_1 = arith.constant 0 : i32
    return %c0_i32, %c0_i32_0 : i32, i32
  }
  func.func @transform_3(%arg0: i32) -> (i32, i32) {
    %c0_i32 = arith.constant 0 : i32
    %c0_i32_0 = arith.constant 0 : i32
    %c0_i32_1 = arith.constant 0 : i32
    return %c0_i32, %c0_i32_0 : i32, i32
  }
  func.func @transform_4(%arg0: i32) -> (i32, i32) {
    %c0_i32 = arith.constant 0 : i32
    %c0_i32_0 = arith.constant 0 : i32
    %c0_i32_1 = arith.constant 0 : i32
    return %c0_i32, %c0_i32_0 : i32, i32
  }
  func.func @transform_5(%arg0: i32) -> (i32, i32) {
    %c0_i32 = arith.constant 0 : i32
    %c0_i32_0 = arith.constant 0 : i32
    %c0_i32_1 = arith.constant 0 : i32
    return %c0_i32, %c0_i32_0 : i32, i32
  }
  func.func @transform_6(%arg0: i32) -> (i32, i32) {
    %c0_i32 = arith.constant 0 : i32
    %c0_i32_0 = arith.constant 0 : i32
    %c0_i32_1 = arith.constant 0 : i32
    return %c0_i32, %c0_i32_0 : i32, i32
  }
  func.func @transform_7(%arg0: i32) -> (i32, i32) {
    %c0_i32 = arith.constant 0 : i32
    %c0_i32_0 = arith.constant 0 : i32
    %c0_i32_1 = arith.constant 0 : i32
    return %c0_i32, %c0_i32_0 : i32, i32
  }
  func.func @transform_8(%arg0: i32) -> (i32, i32) {
    %c0_i32 = arith.constant 0 : i32
    %c0_i32_0 = arith.constant 0 : i32
    %c0_i32_1 = arith.constant 0 : i32
    return %c0_i32, %c0_i32_0 : i32, i32
  }
  func.func @transform_9(%arg0: i32) -> (i32, i32) {
    %c0_i32 = arith.constant 0 : i32
    %c0_i32_0 = arith.constant 0 : i32
    return %arg0, %c0_i32 : i32, i32
  }
}

</mosaic_0001>

<llo_original>
// kernel: tpu_custom_call.1
$region0: #{tpu_custom_call.1}
  #allocation0 [shape = 'u32[]', space=smem, size = 0x4, offset = 0x4, fixed_abs, tag = 'smem constant byte address 0x4 - core index']
  #allocation1 [shape = 'u32[72,128]{1,0:T(1,128)}', space=vmem, size = 0x9000, scoped, tag = 'internal scratch']
  #allocation2 [shape = 'f32[1,1]{1,0:T(1,128)S(1)}', space=vmem, size = 0x200, scoped, tag = 'scoped memory for tpu_custom_call.1']
  %s0 = inlined_call_operand.vmem [shape: bf16[4,24], index: 0, kind: input, shape index: {}]
  %s1 = inlined_call_operand.vmem [shape: bf16[4,8], index: 1, kind: input, shape index: {}]
  %s2 = inlined_call_operand.vmem [shape: bf16[24,64], index: 2, kind: input, shape index: {}]
  %s3 = inlined_call_operand.vmem [shape: bf16[8,64], index: 3, kind: input, shape index: {}]
  %s4 = inlined_call_operand.vmem [shape: f32[1,64], index: 4, kind: input, shape index: {}]
  %s5 = inlined_call_operand.vmem [shape: bf16[64,32], index: 5, kind: input, shape index: {}]
  %s6 = inlined_call_operand.vmem [shape: f32[1,32], index: 6, kind: input, shape index: {}]
  %s7 = inlined_call_operand.vmem [shape: bf16[1,32], index: 7, kind: input, shape index: {}]
  %s8 = inlined_call_operand.<no memory space> [shape: f32[1,1], index: 8, kind: input, shape index: {}]
  %s9 = inlined_call_operand.hbm [shape: f32[1,4], index: 9, kind: output, shape index: {}]
  %s10 = sld [smem:[#allocation0]]
  $region46: #{tpu_custom_call.1} parent=0
    _
  %s12 = ssub.s32 1, %s10
  %s13 = scalar_select 0, %s12, %s10
  %v14 = vstv %s8
  %15 = vst [vmem:[#allocation2] sm:$0x1] %v14
  $region1: #{tpu_custom_call.1} parent=0
    #allocation3 [shape = 'u8[512]{0}', space=vmem, size = 0x400, scoped, tag = 'output window, operand 0, single buffered']
    #allocation4 [shape = 's32[1]{0}', space=sflag, size = 0x4, scoped, tag = 'scoped memory for tpu_custom_call.1']
    %16 = vsyncpa [#allocation4], 0
    // Predicated region
    $region2: #{tpu_custom_call.1} parent=1 // pred_check
      _
    $region3: #{tpu_custom_call.1} parent=1 // pred_check_branch
      %18 = sbr.rel (0) target = $region5
    $region4: #{tpu_custom_call.1} parent=1 // pred_region
      _
    $region5: #{tpu_custom_call.1} parent=1 // pred_fallthru
      _
    // Predicated region
    $region6: #{tpu_custom_call.1} parent=1 // pred_check
      _
    $region7: #{tpu_custom_call.1} parent=1 // pred_check_branch
      %20 = sbr.rel (0) target = $region9
    $region8: #{tpu_custom_call.1} parent=1 // pred_region
      _
    $region9: #{tpu_custom_call.1} parent=1 // pred_fallthru
      _
    // Predicated region
    $region10: #{tpu_custom_call.1} parent=1 // pred_check
      _
    $region11: #{tpu_custom_call.1} parent=1 // pred_check_branch
      %22 = sbr.rel (0) target = $region13
    $region12: #{tpu_custom_call.1} parent=1 // pred_region
      _
    $region13: #{tpu_custom_call.1} parent=1 // pred_fallthru
      _
    // Predicated region
    $region14: #{tpu_custom_call.1} parent=1 // pred_check
      _
    $region15: #{tpu_custom_call.1} parent=1 // pred_check_branch
      %24 = sbr.rel (0) target = $region17
    $region16: #{tpu_custom_call.1} parent=1 // pred_region
      _
    $region17: #{tpu_custom_call.1} parent=1 // pred_fallthru
      _
    // Predicated region
    $region18: #{tpu_custom_call.1} parent=1 // pred_check
      _
    $region19: #{tpu_custom_call.1} parent=1 // pred_check_branch
      %26 = sbr.rel (0) target = $region21
    $region20: #{tpu_custom_call.1} parent=1 // pred_region
      _
    $region21: #{tpu_custom_call.1} parent=1 // pred_fallthru
      _
    // Predicated region
    $region22: #{tpu_custom_call.1} parent=1 // pred_check
      _
    $region23: #{tpu_custom_call.1} parent=1 // pred_check_branch
      %28 = sbr.rel (0) target = $region25
    $region24: #{tpu_custom_call.1} parent=1 // pred_region
      _
    $region25: #{tpu_custom_call.1} parent=1 // pred_fallthru
      _
    // Predicated region
    $region26: #{tpu_custom_call.1} parent=1 // pred_check
      _
    $region27: #{tpu_custom_call.1} parent=1 // pred_check_branch
      %30 = sbr.rel (0) target = $region29
    $region28: #{tpu_custom_call.1} parent=1 // pred_region
      _
    $region29: #{tpu_custom_call.1} parent=1 // pred_fallthru
      _
    // Predicated region
    $region30: #{tpu_custom_call.1} parent=1 // pred_check
      _
    $region31: #{tpu_custom_call.1} parent=1 // pred_check_branch
      %32 = sbr.rel (0) target = $region33
    $region32: #{tpu_custom_call.1} parent=1 // pred_region
      _
    $region33: #{tpu_custom_call.1} parent=1 // pred_fallthru
      _
    // Predicated region
    $region34: #{tpu_custom_call.1} parent=1 // pred_check
      _
    $region35: #{tpu_custom_call.1} parent=1 // pred_check_branch
      %34 = sbr.rel (0) target = $region37
    $region36: #{tpu_custom_call.1} parent=1 // pred_region
      _
    $region37: #{tpu_custom_call.1} parent=1 // pred_fallthru
      _
    %v36 = vld [vmem:[%s0] sm:$0x3]
    %v37 = vld [vmem:[%s2] sm:$0xf]
    %v38 = vld [vmem:[%s2 + $0x4] sm:$0xf]
    %v39 = vld [vmem:[%s2 + $0x8] sm:$0xf]
    %v40 = vld [vmem:[%s1] sm:$0x3]
    %v41 = vld [vmem:[%s3] sm:$0xf]
    %vm42 = vcmask 64512
    %v44 = vsel %vm42, %v40, 0
    %vm46 = vcmask 1043456
    %v48 = vsel %vm46, %v41, 0
    %50 = vmatpush.bf16.msra.mxu0 0
    %51 = vmatpush.bf16.msra.mxu0 0
    %52 = vmatpush.bf16.msra.mxu0 0
    %53 = vmatpush.bf16.msra.mxu0 0
    %54 = vmatpush.bf16.msra.mxu0 0
    %55 = vmatpush.bf16.msra.mxu0 0
    %56 = vmatpush.bf16.msra.mxu0 0
    %57 = vmatpush.bf16.msra.mxu0 %v48
    %58 = vmatmul.bf16.gmra.mxu0 %v44
    %v59 = vpop.f32.mrf.mxu0
    %v60 = vadd.f32 0.0, %v59
    %v61 = vpop.f32.mrf.mxu0
    %62 = vdwg.mxu0
    %v66 = vunpack.c.l.b16 %v37
    %v67 = vunpack.c.l.b16 %v38
    %v68 = vunpack.c.l.b16 %v39
    %v69 = vpack.c.b16 %v67, %v66
    %v70 = vpack.c.b16 %v68, %v68
    %vm72 = vcmask 195584
    %v74 = vsel %vm72, %v36, 0
    %v77 = vsel %vm46, %v70, 0
    %79 = vmatpush.bf16.msra.mxu0 0
    %80 = vmatpush.bf16.msra.mxu0 0
    %81 = vmatpush.bf16.msra.mxu0 0
    %82 = vmatpush.bf16.msra.mxu0 0
    %83 = vmatpush.bf16.msra.mxu0 0
    %84 = vmatpush.bf16.msra.mxu0 0
    %85 = vmatpush.bf16.msra.mxu0 %v77
    %86 = vmatpush.bf16.msra.mxu0 %v69
    %87 = vmatmul.bf16.gmra.mxu0 %v74
    %v88 = vpop.f32.mrf.mxu0
    %v89 = vadd.f32 %v60, %v88
    %v90 = vpop.f32.mrf.mxu0
    %91 = vdwg.mxu0
    %v92 = vld [vmem:[%s4] sm:$0x1]
    %v94 = vperm.slane %v92, 0
    %v96 = vadd.f32 %v89, %v94
    %v97 = vmax.f32 %v96, 0.0
    %v98 = vld [vmem:[%s5] sm:$0xf]
    %v99 = vld [vmem:[%s5 + $0x4] sm:$0xf]
    %v100 = vld [vmem:[%s5 + $0x8] sm:$0xf]
    %v101 = vld [vmem:[%s5 + $0xc] sm:$0xf]
    %v102 = vld [vmem:[%s5 + $0x10] sm:$0xf]
    %v103 = vld [vmem:[%s5 + $0x14] sm:$0xf]
    %v104 = vld [vmem:[%s5 + $0x18] sm:$0xf]
    %v105 = vld [vmem:[%s5 + $0x1c] sm:$0xf]
    %v106 = vld [vmem:[%s6] sm:$0x1]
    %v107 = vpack.c.bf16 %v97, %v97
    %v109 = vperm.slane %v106, 0
    %v119 = vunpack.c.l.b16 %v98
    %v120 = vunpack.c.l.b16 %v99
    %v121 = vunpack.c.l.b16 %v100
    %v122 = vunpack.c.l.b16 %v101
    %v123 = vunpack.c.l.b16 %v102
    %v124 = vunpack.c.l.b16 %v103
    %v125 = vunpack.c.l.b16 %v104
    %v126 = vunpack.c.l.b16 %v105
    %v127 = vpack.c.b16 %v120, %v119
    %v128 = vpack.c.b16 %v122, %v121
    %v129 = vpack.c.b16 %v124, %v123
    %v130 = vpack.c.b16 %v126, %v125
    %vm135 = vcmask 523264
    %v137 = vsel %vm135, %v107, 0
    %139 = vmatpush.bf16.msra.mxu0 0
    %140 = vmatpush.bf16.msra.mxu0 0
    %141 = vmatpush.bf16.msra.mxu0 0
    %142 = vmatpush.bf16.msra.mxu0 0
    %143 = vmatpush.bf16.msra.mxu0 %v130
    %144 = vmatpush.bf16.msra.mxu0 %v129
    %145 = vmatpush.bf16.msra.mxu0 %v128
    %146 = vmatpush.bf16.msra.mxu0 %v127
    %147 = vmatmul.bf16.gmra.mxu0 %v137
    %v148 = vpop.f32.mrf.mxu0
    %v149 = vadd.f32 %v109, %v148
    %v150 = vpop.f32.mrf.mxu0
    %151 = vdwg.mxu0
    %v152 = vmax.f32 %v149, 0.0
    %v153 = vld [vmem:[%s7] sm:$0x1]
    %v154 = vld [vmem:[#allocation2] sm:$0x1]
    %v155 = vpack.c.bf16 %v152, %v152
    %157 = vset.pattern.permute.xlu0 0
    %158 = vperm.xlu0 %157, %v154
    %v159 = vpop.permute.xlu0 %158
    %v161 = vperm.slane %v159, 0
    %vm162 = vcmask 261120
    %v164 = vsel %vm162, %v153, 0
    %v167 = vsel %vm162, %v155, 0
    %169 = vmatpush.bf16.xpose.msra.mxu0 0
    %170 = vmatpush.bf16.xpose.msra.mxu0 0
    %171 = vmatpush.bf16.xpose.msra.mxu0 0
    %172 = vmatpush.bf16.xpose.msra.mxu0 0
    %173 = vmatpush.bf16.xpose.msra.mxu0 0
    %174 = vmatpush.bf16.xpose.msra.mxu0 0
    %175 = vmatpush.bf16.xpose.msra.mxu0 0
    %176 = vmatpush.bf16.xpose.msra.mxu0 %v167
    %177 = vmatmul.bf16.gmra.mxu0 %v164
    %v178 = vpop.f32.mrf.mxu0
    %v179 = vadd.f32 %v161, %v178
    %v180 = vpop.f32.mrf.mxu0
    %181 = vdwg.mxu0
    %vm182 = vcmask 24576
    %183 = vst.msk [vmem:[#allocation3] sm:$0x1] %vm182, %v179
    // Predicated region
    $region38: #{tpu_custom_call.1} parent=1 // pred_check
      _
    $region39: #{tpu_custom_call.1} parent=1 // pred_check_branch
      %185 = sbr.rel (0) target = $region41
    $region40: #{tpu_custom_call.1} parent=1 // pred_region
      %187 = vsyncadd [#allocation4], 0
      %s189 = sshll.u32 [#allocation3], 4
      %s190 = int_to_ptr.vmem [resolvable:$true] %s189
      %s191 = sshll.u32 %s9, 4
      %s192 = int_to_ptr.hbm [resolvable:$true] %s191
      %194 = dma.vmem_to_hbm [thread:$0]  %s190, 16, %s192, [#allocation4]
    $region41: #{tpu_custom_call.1} parent=1 // pred_fallthru
      _
    // Predicated region
    $region42: #{tpu_custom_call.1} parent=1 // pred_check
      _
    $region43: #{tpu_custom_call.1} parent=1 // pred_check_branch
      %196 = sbr.rel (0) target = $region45
    $region44: #{tpu_custom_call.1} parent=1 // pred_region
      %198 = dma.done [#allocation4], 16
    $region45: #{tpu_custom_call.1} parent=1 // pred_fallthru
      _
    %199 = vsyncpa [#allocation4], 1

</llo_original>
